<compile_context>
chip_gen: v7x
topology: tpu7x:2x2x1
jax: 0.10.0
libtpu: 0.0.40
codegen_flags: <defaults>
</compile_context>

<pallas_src>
import jax
import jax.numpy as jnp
from jax.experimental import pallas as pl
from jax.experimental.pallas import tpu as pltpu

PI = 3.14159  # matches the torch.jit.script gaussian() constant exactly
SQRT_2PI = (2.0 * PI) ** 0.5


def _gaussian_kernel(val_ref, mean_ref, nhiv_ref, coef_ref, o_ref):
    # val_ref: (tm, 1) f32 ; mean/nhiv/coef: (1, K) f32 ; o_ref: (tm, K)
    diff = val_ref[...] - mean_ref[...]                       # broadcast (tm, K)
    g = jnp.exp(diff * diff * nhiv_ref[...]) * coef_ref[...]  # exp(-0.5 z^2)/(a*std)
    o_ref[...] = g.astype(o_ref.dtype)


def _round_up(v, m):
    return (v + m - 1) // m * m


def gaussian_layer(x, edge_type, means_w, stds_w, mul_w, bias_w, *, tm=4096):
    """Pallas implementation of GaussianLayer.forward.

    x:          (B, N, N) float
    edge_type:  (B, N, N) int
    means_w:    (1, K)    stds_w: (1, K)
    mul_w:      (edge_types, 1)   bias_w: (edge_types, 1)
    returns     (B, N, N, K) in means_w.dtype
    """
    B, N1, N2 = x.shape
    K = means_w.shape[-1]
    assert K % 128 == 0, "K must be lane-aligned (multiple of 128)"
    M = B * N1 * N2
    out_dtype = means_w.dtype

    # --- XLA glue: embedding gather + affine, fused into one (M, 1) pass ---
    mul = mul_w[edge_type].astype(jnp.float32)           # (B, N, N, 1)
    bias = bias_w[edge_type].astype(jnp.float32)
    val = (mul * x[..., None].astype(jnp.float32) + bias).reshape(M, 1)

    # Tiny (1, K) precomputes: keep the kernel body mul/exp only.
    mean = means_w.reshape(1, K).astype(jnp.float32)
    std = jnp.abs(stds_w.reshape(1, K).astype(jnp.float32)) + 1e-5
    inv_std = 1.0 / std
    neg_half_inv_var = -0.5 * inv_std * inv_std           # -0.5 / std^2
    coef = inv_std / SQRT_2PI                             # 1 / (sqrt(2*pi)*std)

    # Tile the M axis; pad to a tile multiple (garbage rows sliced off below).
    tm = int(min(tm, _round_up(M, 8)))
    Mp = _round_up(M, tm)
    if Mp != M:
        val = jnp.pad(val, ((0, Mp - M), (0, 0)))

    out = pl.pallas_call(
        _gaussian_kernel,
        out_shape=jax.ShapeDtypeStruct((Mp, K), out_dtype),
        grid=(Mp // tm,),
        in_specs=[
            pl.BlockSpec((tm, 1), lambda i: (i, 0)),   # val = mul*x + bias
            pl.BlockSpec((1, K), lambda i: (0, 0)),    # means          (broadcast)
            pl.BlockSpec((1, K), lambda i: (0, 0)),    # -0.5/std^2     (broadcast)
            pl.BlockSpec((1, K), lambda i: (0, 0)),    # 1/(a*std)      (broadcast)
        ],
        out_specs=pl.BlockSpec((tm, K), lambda i: (i, 0)),
        compiler_params=pltpu.CompilerParams(
            dimension_semantics=("parallel",),
            vmem_limit_bytes=32 << 20),
    )(val, mean, neg_half_inv_var, coef)

    if Mp != M:
        out = out[:M]
    return out.reshape(B, N1, N2, K)


def _reference(x, edge_type, means_w, stds_w, mul_w, bias_w):
    # Pure-JAX reference mirroring the PyTorch forward (explicit divides).
    mul = mul_w[edge_type].astype(x.dtype)                 # (B,N,N,1)
    bias = bias_w[edge_type].astype(x.dtype)
    v = mul * x[..., None] + bias                          # (B,N,N,1)
    K = means_w.shape[-1]
    v = jnp.broadcast_to(v, v.shape[:-1] + (K,)).astype(jnp.float32)
    mean = means_w.reshape(-1).astype(jnp.float32)
    std = jnp.abs(stds_w.reshape(-1).astype(jnp.float32)) + 1e-5
    g = jnp.exp(-0.5 * ((v - mean) / std) ** 2) / (SQRT_2PI * std)
    return g.astype(means_w.dtype)


if __name__ == "__main__":
    K = 128
    edge_types = 1024
    B, N = 2, 8

    key = jax.random.PRNGKey(0)
    k_means, k_stds, k_x, k_et = jax.random.split(key, 4)

    # Deterministic parameter init matching the module's __init__:
    means_w = jax.random.uniform(k_means, (1, K), jnp.float32, 0.0, 3.0)
    stds_w = jax.random.uniform(k_stds, (1, K), jnp.float32, 0.0, 3.0)
    mul_w = jnp.ones((edge_types, 1), jnp.float32)     # init.constant_(mul, 1)
    bias_w = jnp.zeros((edge_types, 1), jnp.float32)   # init.constant_(bias, 0)

    # Inputs: pairwise distances + integer edge types.
    x = jax.random.uniform(k_x, (B, N, N), jnp.float32, 0.0, 5.0)
    edge_type = jax.random.randint(k_et, (B, N, N), 0, edge_types, jnp.int32)

    out = gaussian_layer(x, edge_type, means_w, stds_w, mul_w, bias_w)
    out = jax.block_until_ready(out)

    ref = _reference(x, edge_type, means_w, stds_w, mul_w, bias_w)
    assert out.shape == (B, N, N, K), out.shape
    assert out.dtype == means_w.dtype, out.dtype
    assert jnp.allclose(out, ref, atol=1e-5, rtol=1e-4), "mismatch vs reference"

    print("KERNEL_OK")
</pallas_src>

<mosaic_0001>
module attributes {stable_mosaic.version = 11 : i64} {
  func.func @_gaussian_kernel(%arg0: i32, %arg1: memref<128x1xf32, #tpu.memory_space<vmem>>, %arg2: memref<1x128xf32, #tpu.memory_space<vmem>>, %arg3: memref<1x128xf32, #tpu.memory_space<vmem>>, %arg4: memref<1x128xf32, #tpu.memory_space<vmem>>, %arg5: memref<128x128xf32, #tpu.memory_space<vmem>>) attributes {dimension_semantics = [#tpu.dimension_semantics<parallel>], iteration_bounds = array<i64: 1>, scalar_prefetch = 0 : i64, scratch_operands = 0 : i64, tpu.core_type = #tpu.core_type<tc>, window_params = [{transform_indices = @transform_0, window_bounds = array<i64: 128, 1>}, {pipeline_mode = #tpu.pipeline_mode<synchronous>, transform_indices = @transform_1, window_bounds = array<i64: 1, 128>}, {pipeline_mode = #tpu.pipeline_mode<synchronous>, transform_indices = @transform_2, window_bounds = array<i64: 1, 128>}, {pipeline_mode = #tpu.pipeline_mode<synchronous>, transform_indices = @transform_3, window_bounds = array<i64: 1, 128>}, {transform_indices = @transform_4, window_bounds = array<i64: 128, 128>}]} {
    %c0 = arith.constant 0 : index
    %c0_0 = arith.constant 0 : index
    %0 = vector.load %arg1[%c0, %c0_0] : memref<128x1xf32, #tpu.memory_space<vmem>>, vector<128x1xf32>
    %c0_1 = arith.constant 0 : index
    %c0_2 = arith.constant 0 : index
    %1 = vector.load %arg2[%c0_1, %c0_2] : memref<1x128xf32, #tpu.memory_space<vmem>>, vector<1x128xf32>
    %2 = vector.broadcast %0 : vector<128x1xf32> to vector<128x128xf32>
    %3 = vector.broadcast %1 : vector<1x128xf32> to vector<128x128xf32>
    %4 = arith.subf %2, %3 : vector<128x128xf32>
    %5 = arith.mulf %4, %4 : vector<128x128xf32>
    %c0_3 = arith.constant 0 : index
    %c0_4 = arith.constant 0 : index
    %6 = vector.load %arg3[%c0_3, %c0_4] : memref<1x128xf32, #tpu.memory_space<vmem>>, vector<1x128xf32>
    %7 = vector.broadcast %6 : vector<1x128xf32> to vector<128x128xf32>
    %8 = arith.mulf %5, %7 : vector<128x128xf32>
    %9 = math.exp %8 : vector<128x128xf32>
    %c0_5 = arith.constant 0 : index
    %c0_6 = arith.constant 0 : index
    %10 = vector.load %arg4[%c0_5, %c0_6] : memref<1x128xf32, #tpu.memory_space<vmem>>, vector<1x128xf32>
    %11 = vector.broadcast %10 : vector<1x128xf32> to vector<128x128xf32>
    %12 = arith.mulf %9, %11 : vector<128x128xf32>
    %c0_7 = arith.constant 0 : index
    %c0_8 = arith.constant 0 : index
    %13 = vector.load %arg5[%c0_7, %c0_8] : memref<128x128xf32, #tpu.memory_space<vmem>>, vector<128x128xf32>
    tpu.vector_store %arg5[%c0_7, %c0_8], %12 {strides = array<i32>} : memref<128x128xf32, #tpu.memory_space<vmem>>, vector<128x128xf32>,
    return
  }
  func.func @transform_0(%arg0: i32) -> (i32, i32) {
    %c0_i32 = arith.constant 0 : i32
    %c0_i32_0 = arith.constant 0 : i32
    return %arg0, %c0_i32 : i32, i32
  }
  func.func @transform_1(%arg0: i32) -> (i32, i32) {
    %c0_i32 = arith.constant 0 : i32
    %c0_i32_0 = arith.constant 0 : i32
    %c0_i32_1 = arith.constant 0 : i32
    return %c0_i32, %c0_i32_0 : i32, i32
  }
  func.func @transform_2(%arg0: i32) -> (i32, i32) {
    %c0_i32 = arith.constant 0 : i32
    %c0_i32_0 = arith.constant 0 : i32
    %c0_i32_1 = arith.constant 0 : i32
    return %c0_i32, %c0_i32_0 : i32, i32
  }
  func.func @transform_3(%arg0: i32) -> (i32, i32) {
    %c0_i32 = arith.constant 0 : i32
    %c0_i32_0 = arith.constant 0 : i32
    %c0_i32_1 = arith.constant 0 : i32
    return %c0_i32, %c0_i32_0 : i32, i32
  }
  func.func @transform_4(%arg0: i32) -> (i32, i32) {
    %c0_i32 = arith.constant 0 : i32
    %c0_i32_0 = arith.constant 0 : i32
    return %arg0, %c0_i32 : i32, i32
  }
}

</mosaic_0001>

<llo_original>
// kernel: tpu_custom_call.1
$region0: #{tpu_custom_call.1}
  #allocation0 [shape = 'u32[]', space=smem, size = 0x4, offset = 0x4, fixed_abs, tag = 'smem constant byte address 0x4 - core index']
  #allocation1 [shape = 'u32[144,128]{1,0:T(1,128)}', space=vmem, size = 0x12000, scoped, tag = 'internal scratch']
  %s0 = inlined_call_operand.vmem [shape: f32[128,1], index: 0, kind: input, shape index: {}]
  %s1 = inlined_call_operand.vmem [shape: f32[1,128], index: 1, kind: input, shape index: {}]
  %s2 = inlined_call_operand.vmem [shape: f32[1,128], index: 2, kind: input, shape index: {}]
  %s3 = inlined_call_operand.vmem [shape: f32[1,128], index: 3, kind: input, shape index: {}]
  %s4 = inlined_call_operand.hbm [shape: f32[128,128], index: 4, kind: output, shape index: {}]
  %s5 = sld [smem:[#allocation0]]
  $region26: #{tpu_custom_call.1} parent=0
    _
  %s7 = ssub.s32 1, %s5
  %s8 = scalar_select 0, %s7, %s5
  $region1: #{tpu_custom_call.1} parent=0
    #allocation2 [shape = 'u8[65536]{0}', space=vmem, size = 0x10000, scoped, tag = 'output window, operand 0, single buffered']
    #allocation3 [shape = 's32[1]{0}', space=sflag, size = 0x4, scoped, tag = 'scoped memory for tpu_custom_call.1']
    %9 = vsyncpa [#allocation3], 0
    // Predicated region
    $region2: #{tpu_custom_call.1} parent=1 // pred_check
      _
    $region3: #{tpu_custom_call.1} parent=1 // pred_check_branch
      %11 = sbr.rel (0) target = $region5
    $region4: #{tpu_custom_call.1} parent=1 // pred_region
      _
    $region5: #{tpu_custom_call.1} parent=1 // pred_fallthru
      _
    // Predicated region
    $region6: #{tpu_custom_call.1} parent=1 // pred_check
      _
    $region7: #{tpu_custom_call.1} parent=1 // pred_check_branch
      %13 = sbr.rel (0) target = $region9
    $region8: #{tpu_custom_call.1} parent=1 // pred_region
      _
    $region9: #{tpu_custom_call.1} parent=1 // pred_fallthru
      _
    // Predicated region
    $region10: #{tpu_custom_call.1} parent=1 // pred_check
      _
    $region11: #{tpu_custom_call.1} parent=1 // pred_check_branch
      %15 = sbr.rel (0) target = $region13
    $region12: #{tpu_custom_call.1} parent=1 // pred_region
      _
    $region13: #{tpu_custom_call.1} parent=1 // pred_fallthru
      _
    // Predicated region
    $region14: #{tpu_custom_call.1} parent=1 // pred_check
      _
    $region15: #{tpu_custom_call.1} parent=1 // pred_check_branch
      %17 = sbr.rel (0) target = $region17
    $region16: #{tpu_custom_call.1} parent=1 // pred_region
      _
    $region17: #{tpu_custom_call.1} parent=1 // pred_fallthru
      _
    %v18 = vld [vmem:[%s0] sm:$0xff]
    %v19 = vld [vmem:[%s0 + $0x8] sm:$0xff]
    %v20 = vld [vmem:[%s0 + $0x10] sm:$0xff]
    %v21 = vld [vmem:[%s0 + $0x18] sm:$0xff]
    %v22 = vld [vmem:[%s0 + $0x20] sm:$0xff]
    %v23 = vld [vmem:[%s0 + $0x28] sm:$0xff]
    %v24 = vld [vmem:[%s0 + $0x30] sm:$0xff]
    %v25 = vld [vmem:[%s0 + $0x38] sm:$0xff]
    %v26 = vld [vmem:[%s0 + $0x40] sm:$0xff]
    %v27 = vld [vmem:[%s0 + $0x48] sm:$0xff]
    %v28 = vld [vmem:[%s0 + $0x50] sm:$0xff]
    %v29 = vld [vmem:[%s0 + $0x58] sm:$0xff]
    %v30 = vld [vmem:[%s0 + $0x60] sm:$0xff]
    %v31 = vld [vmem:[%s0 + $0x68] sm:$0xff]
    %v32 = vld [vmem:[%s0 + $0x70] sm:$0xff]
    %v33 = vld [vmem:[%s0 + $0x78] sm:$0xff]
    %v34 = vld [vmem:[%s1] sm:$0x1]
    %36 = vset.pattern.permute.xlu0 0
    %37 = vperm.xlu0 %36, %v18
    %v38 = vpop.permute.xlu0 %37
    %41 = vset.pattern.permute.xlu0 0
    %42 = vperm.xlu0 %41, %v19
    %v43 = vpop.permute.xlu0 %42
    %46 = vset.pattern.permute.xlu0 0
    %47 = vperm.xlu0 %46, %v20
    %v48 = vpop.permute.xlu0 %47
    %51 = vset.pattern.permute.xlu0 0
    %52 = vperm.xlu0 %51, %v21
    %v53 = vpop.permute.xlu0 %52
    %56 = vset.pattern.permute.xlu0 0
    %57 = vperm.xlu0 %56, %v22
    %v58 = vpop.permute.xlu0 %57
    %61 = vset.pattern.permute.xlu0 0
    %62 = vperm.xlu0 %61, %v23
    %v63 = vpop.permute.xlu0 %62
    %66 = vset.pattern.permute.xlu0 0
    %67 = vperm.xlu0 %66, %v24
    %v68 = vpop.permute.xlu0 %67
    %71 = vset.pattern.permute.xlu0 0
    %72 = vperm.xlu0 %71, %v25
    %v73 = vpop.permute.xlu0 %72
    %76 = vset.pattern.permute.xlu0 0
    %77 = vperm.xlu0 %76, %v26
    %v78 = vpop.permute.xlu0 %77
    %81 = vset.pattern.permute.xlu0 0
    %82 = vperm.xlu0 %81, %v27
    %v83 = vpop.permute.xlu0 %82
    %86 = vset.pattern.permute.xlu0 0
    %87 = vperm.xlu0 %86, %v28
    %v88 = vpop.permute.xlu0 %87
    %91 = vset.pattern.permute.xlu0 0
    %92 = vperm.xlu0 %91, %v29
    %v93 = vpop.permute.xlu0 %92
    %96 = vset.pattern.permute.xlu0 0
    %97 = vperm.xlu0 %96, %v30
    %v98 = vpop.permute.xlu0 %97
    %101 = vset.pattern.permute.xlu0 0
    %102 = vperm.xlu0 %101, %v31
    %v103 = vpop.permute.xlu0 %102
    %106 = vset.pattern.permute.xlu0 0
    %107 = vperm.xlu0 %106, %v32
    %v108 = vpop.permute.xlu0 %107
    %111 = vset.pattern.permute.xlu0 0
    %112 = vperm.xlu0 %111, %v33
    %v113 = vpop.permute.xlu0 %112
    %v116 = vlaneseq
    %v117 = vshrl.u32 %v116, 7
    %v118 = vsub.s32 0, %v117
    %v119 = vrot.slane %v34, %v118
    %v121 = vsub.f32 %v38, %v119
    %v122 = vsub.f32 %v43, %v119
    %v123 = vsub.f32 %v48, %v119
    %v124 = vsub.f32 %v53, %v119
    %v125 = vsub.f32 %v58, %v119
    %v126 = vsub.f32 %v63, %v119
    %v127 = vsub.f32 %v68, %v119
    %v128 = vsub.f32 %v73, %v119
    %v129 = vsub.f32 %v78, %v119
    %v130 = vsub.f32 %v83, %v119
    %v131 = vsub.f32 %v88, %v119
    %v132 = vsub.f32 %v93, %v119
    %v133 = vsub.f32 %v98, %v119
    %v134 = vsub.f32 %v103, %v119
    %v135 = vsub.f32 %v108, %v119
    %v136 = vsub.f32 %v113, %v119
    %v137 = vmul.f32 %v121, %v121
    %v138 = vmul.f32 %v122, %v122
    %v139 = vmul.f32 %v123, %v123
    %v140 = vmul.f32 %v124, %v124
    %v141 = vmul.f32 %v125, %v125
    %v142 = vmul.f32 %v126, %v126
    %v143 = vmul.f32 %v127, %v127
    %v144 = vmul.f32 %v128, %v128
    %v145 = vmul.f32 %v129, %v129
    %v146 = vmul.f32 %v130, %v130
    %v147 = vmul.f32 %v131, %v131
    %v148 = vmul.f32 %v132, %v132
    %v149 = vmul.f32 %v133, %v133
    %v150 = vmul.f32 %v134, %v134
    %v151 = vmul.f32 %v135, %v135
    %v152 = vmul.f32 %v136, %v136
    %v153 = vld [vmem:[%s2] sm:$0x1]
    %v155 = vlaneseq
    %v156 = vshrl.u32 %v155, 7
    %v157 = vsub.s32 0, %v156
    %v158 = vrot.slane %v153, %v157
    %v160 = vmul.f32 %v137, %v158
    %v161 = vmul.f32 %v138, %v158
    %v162 = vmul.f32 %v139, %v158
    %v163 = vmul.f32 %v140, %v158
    %v164 = vmul.f32 %v141, %v158
    %v165 = vmul.f32 %v142, %v158
    %v166 = vmul.f32 %v143, %v158
    %v167 = vmul.f32 %v144, %v158
    %v168 = vmul.f32 %v145, %v158
    %v169 = vmul.f32 %v146, %v158
    %v170 = vmul.f32 %v147, %v158
    %v171 = vmul.f32 %v148, %v158
    %v172 = vmul.f32 %v149, %v158
    %v173 = vmul.f32 %v150, %v158
    %v174 = vmul.f32 %v151, %v158
    %v175 = vmul.f32 %v152, %v158
    %v176 = vmul.f32 %v160, 1.442695
    %v177 = vpow.pop %v176
    %v178 = vmul.f32 %v161, 1.442695
    %v179 = vpow.pop %v178
    %v180 = vmul.f32 %v162, 1.442695
    %v181 = vpow.pop %v180
    %v182 = vmul.f32 %v163, 1.442695
    %v183 = vpow.pop %v182
    %v184 = vmul.f32 %v164, 1.442695
    %v185 = vpow.pop %v184
    %v186 = vmul.f32 %v165, 1.442695
    %v187 = vpow.pop %v186
    %v188 = vmul.f32 %v166, 1.442695
    %v189 = vpow.pop %v188
    %v190 = vmul.f32 %v167, 1.442695
    %v191 = vpow.pop %v190
    %v192 = vmul.f32 %v168, 1.442695
    %v193 = vpow.pop %v192
    %v194 = vmul.f32 %v169, 1.442695
    %v195 = vpow.pop %v194
    %v196 = vmul.f32 %v170, 1.442695
    %v197 = vpow.pop %v196
    %v198 = vmul.f32 %v171, 1.442695
    %v199 = vpow.pop %v198
    %v200 = vmul.f32 %v172, 1.442695
    %v201 = vpow.pop %v200
    %v202 = vmul.f32 %v173, 1.442695
    %v203 = vpow.pop %v202
    %v204 = vmul.f32 %v174, 1.442695
    %v205 = vpow.pop %v204
    %v206 = vmul.f32 %v175, 1.442695
    %v207 = vpow.pop %v206
    %v208 = vld [vmem:[%s3] sm:$0x1]
    %v210 = vlaneseq
    %v211 = vshrl.u32 %v210, 7
    %v212 = vsub.s32 0, %v211
    %v213 = vrot.slane %v208, %v212
    %v215 = vmul.f32 %v177, %v213
    %v216 = vmul.f32 %v179, %v213
    %v217 = vmul.f32 %v181, %v213
    %v218 = vmul.f32 %v183, %v213
    %v219 = vmul.f32 %v185, %v213
    %v220 = vmul.f32 %v187, %v213
    %v221 = vmul.f32 %v189, %v213
    %v222 = vmul.f32 %v191, %v213
    %v223 = vmul.f32 %v193, %v213
    %v224 = vmul.f32 %v195, %v213
    %v225 = vmul.f32 %v197, %v213
    %v226 = vmul.f32 %v199, %v213
    %v227 = vmul.f32 %v201, %v213
    %v228 = vmul.f32 %v203, %v213
    %v229 = vmul.f32 %v205, %v213
    %v230 = vmul.f32 %v207, %v213
    %231 = vst [vmem:[#allocation2] sm:$0xff] %v215
    %232 = vst [vmem:[#allocation2 + $0x8] sm:$0xff] %v216
    %233 = vst [vmem:[#allocation2 + $0x10] sm:$0xff] %v217
    %234 = vst [vmem:[#allocation2 + $0x18] sm:$0xff] %v218
    %235 = vst [vmem:[#allocation2 + $0x20] sm:$0xff] %v219
    %236 = vst [vmem:[#allocation2 + $0x28] sm:$0xff] %v220
    %237 = vst [vmem:[#allocation2 + $0x30] sm:$0xff] %v221
    %238 = vst [vmem:[#allocation2 + $0x38] sm:$0xff] %v222
    %239 = vst [vmem:[#allocation2 + $0x40] sm:$0xff] %v223
    %240 = vst [vmem:[#allocation2 + $0x48] sm:$0xff] %v224
    %241 = vst [vmem:[#allocation2 + $0x50] sm:$0xff] %v225
    %242 = vst [vmem:[#allocation2 + $0x58] sm:$0xff] %v226
    %243 = vst [vmem:[#allocation2 + $0x60] sm:$0xff] %v227
    %244 = vst [vmem:[#allocation2 + $0x68] sm:$0xff] %v228
    %245 = vst [vmem:[#allocation2 + $0x70] sm:$0xff] %v229
    %246 = vst [vmem:[#allocation2 + $0x78] sm:$0xff] %v230
    // Predicated region
    $region18: #{tpu_custom_call.1} parent=1 // pred_check
      _
    $region19: #{tpu_custom_call.1} parent=1 // pred_check_branch
      %248 = sbr.rel (0) target = $region21
    $region20: #{tpu_custom_call.1} parent=1 // pred_region
      %s250 = ssub.s32 2048, 2048
      %251 = vsyncadd [#allocation3], %s250
      %s252 = sshll.u32 [#allocation2], 4
      %s253 = int_to_ptr.vmem [resolvable:$true] %s252
      %258 = dma.vmem_to_hbm [thread:$0]  %s253, 2048, %s4, [#allocation3], 128, 128, 8
    $region21: #{tpu_custom_call.1} parent=1 // pred_fallthru
      _
    // Predicated region
    $region22: #{tpu_custom_call.1} parent=1 // pred_check
      _
    $region23: #{tpu_custom_call.1} parent=1 // pred_check_branch
      %260 = sbr.rel (0) target = $region25
    $region24: #{tpu_custom_call.1} parent=1 // pred_region
      %261 = dma.done [#allocation3], 2048
    $region25: #{tpu_custom_call.1} parent=1 // pred_fallthru
      _
    %262 = vsyncpa [#allocation3], 1

</llo_original>
